<compile_context>
chip_gen: v7x
topology: tpu7x:2x2x1
jax: 0.10.0
libtpu: 0.0.40
codegen_flags: <defaults>
</compile_context>

<pallas_src>
import math

import jax
import jax.numpy as jnp
from jax.experimental import pallas as pl
from jax.experimental.pallas import tpu as pltpu

LANE = 128  # lane-dense channel padding width


def make_tcn_kernel(layer_cfgs, K, L, C):
    """Fused TCN kernel: all TemporalBlocks for one batch element."""

    def kernel(*refs):
        x_ref = refs[0]
        o_ref = refs[-1]
        wrefs = refs[1:-1]

        x = x_ref[...].astype(jnp.float32)                      # (L, C)
        row = jax.lax.broadcasted_iota(jnp.int32, (L, C), 0)    # hoisted once

        idx = 0
        for dilation, has_down in layer_cfgs:                   # few layers, static
            w_ref, b_ref = wrefs[idx], wrefs[idx + 1]
            idx += 2
            if has_down:
                wd_ref, bd_ref = wrefs[idx], wrefs[idx + 1]
                idx += 2

            # K causal-shifted taps -> single lane-dense (L, K*C) MXU operand.
            taps = []
            for k in range(K):
                s = (K - 1 - k) * dilation      # right-shift for this tap
                if s == 0:
                    taps.append(x)
                elif s >= L:
                    taps.append(jnp.zeros_like(x))
                else:
                    rolled = pltpu.roll(x, shift=s, axis=0)     # XLU rotate
                    taps.append(jnp.where(row >= s, rolled, 0.0))
            xcat = jnp.concatenate(taps, axis=-1).astype(jnp.bfloat16)

            # Fused causal dilated conv (conv + Chomp1d) + bias + ReLU.
            acc = jnp.dot(xcat, w_ref[...], preferred_element_type=jnp.float32)
            out = jnp.maximum(acc + b_ref[...], 0.0)
            # TODO(synk): Dropout1d treated as identity (eval/inference mode).

            # Residual branch (1x1 conv when channel counts differ).
            if has_down:
                res = jnp.dot(x.astype(jnp.bfloat16), wd_ref[...],
                              preferred_element_type=jnp.float32) + bd_ref[...]
            else:
                res = x
            x = jnp.maximum(out + res, 0.0)

        o_ref[...] = x                                          # lane-dense store

    return kernel


def temporal_conv_net(x_ncl, params):
    """x_ncl: (N, C, L) — same layout PyTorch's Conv1d expects."""
    N, Cin, L = x_ncl.shape
    C = LANE
    K = params[0]["w"].shape[2]
    assert Cin <= C and all(p["w"].shape[0] <= C for p in params)

    # One-time layout glue: NCL -> NLC, zero-pad channels to 128 lanes, bf16.
    x = jnp.transpose(x_ncl, (0, 2, 1))
    x = jnp.pad(x, ((0, 0), (0, 0), (0, C - Cin))).astype(jnp.bfloat16)

    inputs = [x]
    in_specs = [pl.BlockSpec((None, L, C), lambda n: (n, 0, 0))]
    layer_cfgs = []
    for p in params:
        w_eff = p["w"]                          # (Cout, Cin_l, K) PyTorch layout
        Cout, Cin_l, _ = w_eff.shape
        # -> (K, Cin_l, Cout), zero-pad to (K, C, C), flatten taps -> (K*C, C).
        w_k = jnp.transpose(w_eff, (2, 1, 0))
        w_k = jnp.pad(w_k, ((0, 0), (0, C - Cin_l), (0, C - Cout)))
        w_stack = w_k.reshape(K * C, C).astype(jnp.bfloat16)
        b = jnp.pad(p["b"], (0, C - Cout)).reshape(1, C).astype(jnp.float32)
        inputs += [w_stack, b]
        in_specs += [pl.BlockSpec((K * C, C), lambda n: (0, 0)),
                     pl.BlockSpec((1, C), lambda n: (0, 0))]
        has_down = p["wd"] is not None
        if has_down:
            wd = jnp.pad(p["wd"][:, :, 0].T,
                         ((0, C - Cin_l), (0, C - Cout))).astype(jnp.bfloat16)
            bd = jnp.pad(p["bd"], (0, C - Cout)).reshape(1, C).astype(jnp.float32)
            inputs += [wd, bd]
            in_specs += [pl.BlockSpec((C, C), lambda n: (0, 0)),
                         pl.BlockSpec((1, C), lambda n: (0, 0))]
        layer_cfgs.append((int(p["dilation"]), has_down))

    Cout_last = params[-1]["w"].shape[0]
    kern = make_tcn_kernel(tuple(layer_cfgs), K, L, C)
    y = pl.pallas_call(
        kern,
        grid=(N,),
        in_specs=in_specs,
        out_specs=pl.BlockSpec((None, L, C), lambda n: (n, 0, 0)),
        out_shape=jax.ShapeDtypeStruct((N, L, C), jnp.float32),
        compiler_params=pltpu.CompilerParams(
            dimension_semantics=("parallel",)),
    )(*inputs)
    # Drop channel padding, NLC -> NCL (layout glue).
    return jnp.transpose(y[:, :, :Cout_last], (0, 2, 1))


def init_tcn_params(key, num_inputs, num_channels, kernel_size=2):
    """Deterministic synthetic parameters matching the module's shapes."""
    params = []
    in_c = num_inputs
    for i, out_c in enumerate(num_channels):
        key, kv, kg, kb, kdw, kdb = jax.random.split(key, 6)
        # conv1 (weight-normalized): v (Cout, Cin, K), g (Cout,)
        fan_in, fan_out = in_c * kernel_size, out_c * kernel_size
        bound = math.sqrt(6.0 / (fan_in + fan_out))        # xavier_uniform bound
        v = jax.random.uniform(kv, (out_c, in_c, kernel_size), jnp.float32,
                               -bound, bound)
        g = jax.random.uniform(kg, (out_c,), jnp.float32, 0.5, 1.5)
        norm = jnp.sqrt(jnp.sum(v * v, axis=(1, 2), keepdims=True))
        w_eff = g[:, None, None] * v / norm                # weight_norm reparam (glue)
        bb = 1.0 / math.sqrt(in_c * kernel_size)
        b = jax.random.uniform(kb, (out_c,), jnp.float32, -bb, bb)
        if in_c != out_c:                                  # downsample 1x1 conv
            db = math.sqrt(6.0 / (in_c + out_c))
            wd = jax.random.uniform(kdw, (out_c, in_c, 1), jnp.float32, -db, db)
            bdb = 1.0 / math.sqrt(in_c)
            bd = jax.random.uniform(kdb, (out_c,), jnp.float32, -bdb, bdb)
        else:
            wd, bd = None, None
        params.append(dict(w=w_eff, b=b, wd=wd, bd=bd, dilation=2 ** i))
        in_c = out_c
    return params


# ---------------- pure-JAX f32 reference (correctness check only) -------------
def _ref_block(x_nlc, w, b, wd, bd, dilation):
    K = w.shape[2]
    P = (K - 1) * dilation
    L = x_nlc.shape[1]
    xpad = jnp.pad(x_nlc, ((0, 0), (P, 0), (0, 0)))
    acc = b[None, None, :]
    for k in range(K):
        acc = acc + jnp.einsum("nlc,oc->nlo",
                               xpad[:, k * dilation:k * dilation + L, :], w[:, :, k])
    out = jnp.maximum(acc, 0.0)
    if wd is None:
        res = x_nlc
    else:
        res = jnp.einsum("nlc,oc->nlo", x_nlc, wd[:, :, 0]) + bd[None, None, :]
    return jnp.maximum(out + res, 0.0)


if __name__ == "__main__":
    key = jax.random.PRNGKey(0)
    kx, kp = jax.random.split(key)

    # Small shapes consistent with the module: TemporalConvNet(num_inputs=4,
    # num_channels=[8, 8, 12], kernel_size=2) applied to x of shape (N=2, C=4, L=16).
    N, Cin, L = 2, 4, 16
    num_channels = [8, 8, 12]
    x = jax.random.normal(kx, (N, Cin, L), jnp.float32)
    params = init_tcn_params(kp, Cin, num_channels, kernel_size=2)

    y = jax.block_until_ready(temporal_conv_net(x, params))

    # Verify against a plain-JAX f32 reference of the same math (bf16 MXU
    # operands with f32 accumulation -> loosened tolerance).
    xr = jnp.transpose(x, (0, 2, 1))
    for p in params:
        xr = _ref_block(xr, p["w"], p["b"], p["wd"], p["bd"], p["dilation"])
    y_ref = jnp.transpose(xr, (0, 2, 1))

    assert y.shape == (N, num_channels[-1], L)
    assert jnp.allclose(y, y_ref, atol=5e-2, rtol=5e-2), \
        float(jnp.max(jnp.abs(y - y_ref)))
    print("KERNEL_OK")
</pallas_src>

<mosaic_0001>
module attributes {stable_mosaic.version = 11 : i64} {
  func.func @kernel(%arg0: i32, %arg1: memref<1x16x128xbf16, #tpu.memory_space<vmem>>, %arg2: memref<256x128xbf16, #tpu.memory_space<vmem>>, %arg3: memref<1x128xf32, #tpu.memory_space<vmem>>, %arg4: memref<128x128xbf16, #tpu.memory_space<vmem>>, %arg5: memref<1x128xf32, #tpu.memory_space<vmem>>, %arg6: memref<256x128xbf16, #tpu.memory_space<vmem>>, %arg7: memref<1x128xf32, #tpu.memory_space<vmem>>, %arg8: memref<256x128xbf16, #tpu.memory_space<vmem>>, %arg9: memref<1x128xf32, #tpu.memory_space<vmem>>, %arg10: memref<128x128xbf16, #tpu.memory_space<vmem>>, %arg11: memref<1x128xf32, #tpu.memory_space<vmem>>, %arg12: memref<1x16x128xf32, #tpu.memory_space<vmem>>) attributes {dimension_semantics = [#tpu.dimension_semantics<parallel>], iteration_bounds = array<i64: 2>, scalar_prefetch = 0 : i64, scratch_operands = 0 : i64, tpu.core_type = #tpu.core_type<tc>, window_params = [{transform_indices = @transform_0, window_bounds = array<i64: 1, 16, 128>}, {pipeline_mode = #tpu.pipeline_mode<synchronous>, transform_indices = @transform_1, window_bounds = array<i64: 256, 128>}, {pipeline_mode = #tpu.pipeline_mode<synchronous>, transform_indices = @transform_2, window_bounds = array<i64: 1, 128>}, {pipeline_mode = #tpu.pipeline_mode<synchronous>, transform_indices = @transform_3, window_bounds = array<i64: 128, 128>}, {pipeline_mode = #tpu.pipeline_mode<synchronous>, transform_indices = @transform_4, window_bounds = array<i64: 1, 128>}, {pipeline_mode = #tpu.pipeline_mode<synchronous>, transform_indices = @transform_5, window_bounds = array<i64: 256, 128>}, {pipeline_mode = #tpu.pipeline_mode<synchronous>, transform_indices = @transform_6, window_bounds = array<i64: 1, 128>}, {pipeline_mode = #tpu.pipeline_mode<synchronous>, transform_indices = @transform_7, window_bounds = array<i64: 256, 128>}, {pipeline_mode = #tpu.pipeline_mode<synchronous>, transform_indices = @transform_8, window_bounds = array<i64: 1, 128>}, {pipeline_mode = #tpu.pipeline_mode<synchronous>, transform_indices = @transform_9, window_bounds = array<i64: 128, 128>}, {pipeline_mode = #tpu.pipeline_mode<synchronous>, transform_indices = @transform_10, window_bounds = array<i64: 1, 128>}, {transform_indices = @transform_11, window_bounds = array<i64: 1, 16, 128>}]} {
    %c0 = arith.constant 0 : index
    %c0_0 = arith.constant 0 : index
    %c0_1 = arith.constant 0 : index
    %0 = vector.load %arg1[%c0, %c0_0, %c0_1] : memref<1x16x128xbf16, #tpu.memory_space<vmem>>, vector<1x16x128xbf16>
    %1 = vector.shape_cast %0 : vector<1x16x128xbf16> to vector<16x128xbf16>
    %2 = arith.extf %1 : vector<16x128xbf16> to vector<16x128xf32>
    %3 = tpu.iota {dimensions = array<i32: 0>} : vector<16x128xi32>
    %c1_i32 = arith.constant 1 : i32
    %4 = tpu.dynamic_rotate %2 by %c1_i32 dim 0 : vector<16x128xf32>, i32 -> vector<16x128xf32>
    %c1_i32_2 = arith.constant 1 : i32
    %5 = vector.broadcast %c1_i32_2 : i32 to vector<16x128xi32>
    %6 = arith.cmpi sge, %3, %5 : vector<16x128xi32>
    %cst = arith.constant 0.000000e+00 : f32
    %7 = vector.broadcast %cst : f32 to vector<16x128xf32>
    %8 = arith.select %6, %4, %7 : vector<16x128xi1>, vector<16x128xf32>
    %9 = tpu.concatenate %8, %2 in 1 : vector<16x128xf32>, vector<16x128xf32> -> vector<16x256xf32>
    %10 = arith.truncf %9 : vector<16x256xf32> to vector<16x256xbf16>
    %c0_3 = arith.constant 0 : index
    %c0_4 = arith.constant 0 : index
    %11 = vector.load %arg2[%c0_3, %c0_4] : memref<256x128xbf16, #tpu.memory_space<vmem>>, vector<256x128xbf16>
    %cst_5 = arith.constant dense<0.000000e+00> : vector<16x128xf32>
    %12 = tpu.matmul %10, %11, %cst_5 {dimension_numbers = #tpu.dot_dimension_numbers<[1], [0], [0], [1], [0, 0, 1, 1], [], []>} : vector<16x256xbf16>, vector<256x128xbf16>, vector<16x128xf32> -> vector<16x128xf32>
    %c0_6 = arith.constant 0 : index
    %c0_7 = arith.constant 0 : index
    %13 = vector.load %arg3[%c0_6, %c0_7] : memref<1x128xf32, #tpu.memory_space<vmem>>, vector<1x128xf32>
    %14 = vector.broadcast %13 : vector<1x128xf32> to vector<16x128xf32>
    %15 = arith.addf %12, %14 : vector<16x128xf32>
    %cst_8 = arith.constant 0.000000e+00 : f32
    %16 = vector.broadcast %cst_8 : f32 to vector<16x128xf32>
    %17 = arith.maximumf %15, %16 : vector<16x128xf32>
    %18 = arith.truncf %2 : vector<16x128xf32> to vector<16x128xbf16>
    %c0_9 = arith.constant 0 : index
    %c0_10 = arith.constant 0 : index
    %19 = vector.load %arg4[%c0_9, %c0_10] : memref<128x128xbf16, #tpu.memory_space<vmem>>, vector<128x128xbf16>
    %cst_11 = arith.constant dense<0.000000e+00> : vector<16x128xf32>
    %20 = tpu.matmul %18, %19, %cst_11 {dimension_numbers = #tpu.dot_dimension_numbers<[1], [0], [0], [1], [0, 0, 1, 1], [], []>} : vector<16x128xbf16>, vector<128x128xbf16>, vector<16x128xf32> -> vector<16x128xf32>
    %c0_12 = arith.constant 0 : index
    %c0_13 = arith.constant 0 : index
    %21 = vector.load %arg5[%c0_12, %c0_13] : memref<1x128xf32, #tpu.memory_space<vmem>>, vector<1x128xf32>
    %22 = vector.broadcast %21 : vector<1x128xf32> to vector<16x128xf32>
    %23 = arith.addf %20, %22 : vector<16x128xf32>
    %24 = arith.addf %17, %23 : vector<16x128xf32>
    %cst_14 = arith.constant 0.000000e+00 : f32
    %25 = vector.broadcast %cst_14 : f32 to vector<16x128xf32>
    %26 = arith.maximumf %24, %25 : vector<16x128xf32>
    %c2_i32 = arith.constant 2 : i32
    %27 = tpu.dynamic_rotate %26 by %c2_i32 dim 0 : vector<16x128xf32>, i32 -> vector<16x128xf32>
    %c2_i32_15 = arith.constant 2 : i32
    %28 = vector.broadcast %c2_i32_15 : i32 to vector<16x128xi32>
    %29 = arith.cmpi sge, %3, %28 : vector<16x128xi32>
    %cst_16 = arith.constant 0.000000e+00 : f32
    %30 = vector.broadcast %cst_16 : f32 to vector<16x128xf32>
    %31 = arith.select %29, %27, %30 : vector<16x128xi1>, vector<16x128xf32>
    %32 = tpu.concatenate %31, %26 in 1 : vector<16x128xf32>, vector<16x128xf32> -> vector<16x256xf32>
    %33 = arith.truncf %32 : vector<16x256xf32> to vector<16x256xbf16>
    %c0_17 = arith.constant 0 : index
    %c0_18 = arith.constant 0 : index
    %34 = vector.load %arg6[%c0_17, %c0_18] : memref<256x128xbf16, #tpu.memory_space<vmem>>, vector<256x128xbf16>
    %cst_19 = arith.constant dense<0.000000e+00> : vector<16x128xf32>
    %35 = tpu.matmul %33, %34, %cst_19 {dimension_numbers = #tpu.dot_dimension_numbers<[1], [0], [0], [1], [0, 0, 1, 1], [], []>} : vector<16x256xbf16>, vector<256x128xbf16>, vector<16x128xf32> -> vector<16x128xf32>
    %c0_20 = arith.constant 0 : index
    %c0_21 = arith.constant 0 : index
    %36 = vector.load %arg7[%c0_20, %c0_21] : memref<1x128xf32, #tpu.memory_space<vmem>>, vector<1x128xf32>
    %37 = vector.broadcast %36 : vector<1x128xf32> to vector<16x128xf32>
    %38 = arith.addf %35, %37 : vector<16x128xf32>
    %cst_22 = arith.constant 0.000000e+00 : f32
    %39 = vector.broadcast %cst_22 : f32 to vector<16x128xf32>
    %40 = arith.maximumf %38, %39 : vector<16x128xf32>
    %41 = arith.addf %40, %26 : vector<16x128xf32>
    %cst_23 = arith.constant 0.000000e+00 : f32
    %42 = vector.broadcast %cst_23 : f32 to vector<16x128xf32>
    %43 = arith.maximumf %41, %42 : vector<16x128xf32>
    %c4_i32 = arith.constant 4 : i32
    %44 = tpu.dynamic_rotate %43 by %c4_i32 dim 0 : vector<16x128xf32>, i32 -> vector<16x128xf32>
    %c4_i32_24 = arith.constant 4 : i32
    %45 = vector.broadcast %c4_i32_24 : i32 to vector<16x128xi32>
    %46 = arith.cmpi sge, %3, %45 : vector<16x128xi32>
    %cst_25 = arith.constant 0.000000e+00 : f32
    %47 = vector.broadcast %cst_25 : f32 to vector<16x128xf32>
    %48 = arith.select %46, %44, %47 : vector<16x128xi1>, vector<16x128xf32>
    %49 = tpu.concatenate %48, %43 in 1 : vector<16x128xf32>, vector<16x128xf32> -> vector<16x256xf32>
    %50 = arith.truncf %49 : vector<16x256xf32> to vector<16x256xbf16>
    %c0_26 = arith.constant 0 : index
    %c0_27 = arith.constant 0 : index
    %51 = vector.load %arg8[%c0_26, %c0_27] : memref<256x128xbf16, #tpu.memory_space<vmem>>, vector<256x128xbf16>
    %cst_28 = arith.constant dense<0.000000e+00> : vector<16x128xf32>
    %52 = tpu.matmul %50, %51, %cst_28 {dimension_numbers = #tpu.dot_dimension_numbers<[1], [0], [0], [1], [0, 0, 1, 1], [], []>} : vector<16x256xbf16>, vector<256x128xbf16>, vector<16x128xf32> -> vector<16x128xf32>
    %c0_29 = arith.constant 0 : index
    %c0_30 = arith.constant 0 : index
    %53 = vector.load %arg9[%c0_29, %c0_30] : memref<1x128xf32, #tpu.memory_space<vmem>>, vector<1x128xf32>
    %54 = vector.broadcast %53 : vector<1x128xf32> to vector<16x128xf32>
    %55 = arith.addf %52, %54 : vector<16x128xf32>
    %cst_31 = arith.constant 0.000000e+00 : f32
    %56 = vector.broadcast %cst_31 : f32 to vector<16x128xf32>
    %57 = arith.maximumf %55, %56 : vector<16x128xf32>
    %58 = arith.truncf %43 : vector<16x128xf32> to vector<16x128xbf16>
    %c0_32 = arith.constant 0 : index
    %c0_33 = arith.constant 0 : index
    %59 = vector.load %arg10[%c0_32, %c0_33] : memref<128x128xbf16, #tpu.memory_space<vmem>>, vector<128x128xbf16>
    %cst_34 = arith.constant dense<0.000000e+00> : vector<16x128xf32>
    %60 = tpu.matmul %58, %59, %cst_34 {dimension_numbers = #tpu.dot_dimension_numbers<[1], [0], [0], [1], [0, 0, 1, 1], [], []>} : vector<16x128xbf16>, vector<128x128xbf16>, vector<16x128xf32> -> vector<16x128xf32>
    %c0_35 = arith.constant 0 : index
    %c0_36 = arith.constant 0 : index
    %61 = vector.load %arg11[%c0_35, %c0_36] : memref<1x128xf32, #tpu.memory_space<vmem>>, vector<1x128xf32>
    %62 = vector.broadcast %61 : vector<1x128xf32> to vector<16x128xf32>
    %63 = arith.addf %60, %62 : vector<16x128xf32>
    %64 = arith.addf %57, %63 : vector<16x128xf32>
    %cst_37 = arith.constant 0.000000e+00 : f32
    %65 = vector.broadcast %cst_37 : f32 to vector<16x128xf32>
    %66 = arith.maximumf %64, %65 : vector<16x128xf32>
    %c0_38 = arith.constant 0 : index
    %c0_39 = arith.constant 0 : index
    %c0_40 = arith.constant 0 : index
    %67 = vector.load %arg12[%c0_38, %c0_39, %c0_40] : memref<1x16x128xf32, #tpu.memory_space<vmem>>, vector<1x16x128xf32>
    %68 = vector.shape_cast %67 : vector<1x16x128xf32> to vector<16x128xf32>
    %69 = vector.shape_cast %66 : vector<16x128xf32> to vector<1x16x128xf32>
    tpu.vector_store %arg12[%c0_38, %c0_39, %c0_40], %69 {strides = array<i32>} : memref<1x16x128xf32, #tpu.memory_space<vmem>>, vector<1x16x128xf32>,
    return
  }
  func.func @transform_0(%arg0: i32) -> (i32, i32, i32) {
    %c0_i32 = arith.constant 0 : i32
    %c0_i32_0 = arith.constant 0 : i32
    %c0_i32_1 = arith.constant 0 : i32
    return %arg0, %c0_i32, %c0_i32_0 : i32, i32, i32
  }
  func.func @transform_1(%arg0: i32) -> (i32, i32) {
    %c0_i32 = arith.constant 0 : i32
    %c0_i32_0 = arith.constant 0 : i32
    %c0_i32_1 = arith.constant 0 : i32
    return %c0_i32, %c0_i32_0 : i32, i32
  }
  func.func @transform_2(%arg0: i32) -> (i32, i32) {
    %c0_i32 = arith.constant 0 : i32
    %c0_i32_0 = arith.constant 0 : i32
    %c0_i32_1 = arith.constant 0 : i32
    return %c0_i32, %c0_i32_0 : i32, i32
  }
  func.func @transform_3(%arg0: i32) -> (i32, i32) {
    %c0_i32 = arith.constant 0 : i32
    %c0_i32_0 = arith.constant 0 : i32
    %c0_i32_1 = arith.constant 0 : i32
    return %c0_i32, %c0_i32_0 : i32, i32
  }
  func.func @transform_4(%arg0: i32) -> (i32, i32) {
    %c0_i32 = arith.constant 0 : i32
    %c0_i32_0 = arith.constant 0 : i32
    %c0_i32_1 = arith.constant 0 : i32
    return %c0_i32, %c0_i32_0 : i32, i32
  }
  func.func @transform_5(%arg0: i32) -> (i32, i32) {
    %c0_i32 = arith.constant 0 : i32
    %c0_i32_0 = arith.constant 0 : i32
    %c0_i32_1 = arith.constant 0 : i32
    return %c0_i32, %c0_i32_0 : i32, i32
  }
  func.func @transform_6(%arg0: i32) -> (i32, i32) {
    %c0_i32 = arith.constant 0 : i32
    %c0_i32_0 = arith.constant 0 : i32
    %c0_i32_1 = arith.constant 0 : i32
    return %c0_i32, %c0_i32_0 : i32, i32
  }
  func.func @transform_7(%arg0: i32) -> (i32, i32) {
    %c0_i32 = arith.constant 0 : i32
    %c0_i32_0 = arith.constant 0 : i32
    %c0_i32_1 = arith.constant 0 : i32
    return %c0_i32, %c0_i32_0 : i32, i32
  }
  func.func @transform_8(%arg0: i32) -> (i32, i32) {
    %c0_i32 = arith.constant 0 : i32
    %c0_i32_0 = arith.constant 0 : i32
    %c0_i32_1 = arith.constant 0 : i32
    return %c0_i32, %c0_i32_0 : i32, i32
  }
  func.func @transform_9(%arg0: i32) -> (i32, i32) {
    %c0_i32 = arith.constant 0 : i32
    %c0_i32_0 = arith.constant 0 : i32
    %c0_i32_1 = arith.constant 0 : i32
    return %c0_i32, %c0_i32_0 : i32, i32
  }
  func.func @transform_10(%arg0: i32) -> (i32, i32) {
    %c0_i32 = arith.constant 0 : i32
    %c0_i32_0 = arith.constant 0 : i32
    %c0_i32_1 = arith.constant 0 : i32
    return %c0_i32, %c0_i32_0 : i32, i32
  }
  func.func @transform_11(%arg0: i32) -> (i32, i32, i32) {
    %c0_i32 = arith.constant 0 : i32
    %c0_i32_0 = arith.constant 0 : i32
    %c0_i32_1 = arith.constant 0 : i32
    return %arg0, %c0_i32, %c0_i32_0 : i32, i32, i32
  }
}

</mosaic_0001>

<llo_original>
// kernel: tpu_custom_call.1
$region0: #{tpu_custom_call.1}
  #allocation0 [shape = 'u32[]', space=smem, size = 0x4, offset = 0x4, fixed_abs, tag = 'smem constant byte address 0x4 - core index']
  #allocation1 [shape = 'u32[144,128]{1,0:T(1,128)}', space=vmem, size = 0x12000, scoped, tag = 'internal scratch']
  %s0 = inlined_call_operand.hbm [shape: bf16[2,16,128], index: 0, kind: input, shape index: {}]
  %s1 = inlined_call_operand.hbm [shape: bf16[256,128], index: 1, kind: input, shape index: {}]
  %s2 = inlined_call_operand.vmem [shape: f32[1,128], index: 2, kind: input, shape index: {}]
  %s3 = inlined_call_operand.hbm [shape: bf16[128,128], index: 3, kind: input, shape index: {}]
  %s4 = inlined_call_operand.vmem [shape: f32[1,128], index: 4, kind: input, shape index: {}]
  %s5 = inlined_call_operand.hbm [shape: bf16[256,128], index: 5, kind: input, shape index: {}]
  %s6 = inlined_call_operand.vmem [shape: f32[1,128], index: 6, kind: input, shape index: {}]
  %s7 = inlined_call_operand.hbm [shape: bf16[256,128], index: 7, kind: input, shape index: {}]
  %s8 = inlined_call_operand.vmem [shape: f32[1,128], index: 8, kind: input, shape index: {}]
  %s9 = inlined_call_operand.hbm [shape: bf16[128,128], index: 9, kind: input, shape index: {}]
  %s10 = inlined_call_operand.vmem [shape: f32[1,128], index: 10, kind: input, shape index: {}]
  %s11 = inlined_call_operand.hbm [shape: f32[2,16,128], index: 11, kind: output, shape index: {}]
  %s12 = sld [smem:[#allocation0]]
  $region101: #{tpu_custom_call.1} parent=0
    _
  %s14 = ssub.s32 1, %s12
  %s15 = scalar_select 0, %s14, %s12
  $region1: #{tpu_custom_call.1} parent=0
    #allocation2 [shape = 'u8[8192]{0}', space=vmem, size = 0x2000, scoped, tag = 'input window, operand 0']
    #allocation3 [shape = 's32[2]{0}', space=sflag, size = 0x8, scoped, tag = 'scoped memory for tpu_custom_call.1']
    #allocation4 [shape = 's32[2]{0}', space=sflag, size = 0x8, scoped, tag = 'scoped memory for tpu_custom_call.1']
    #allocation5 [shape = 'u8[65536]{0}', space=vmem, size = 0x10000, scoped, tag = 'input window, operand 1, single buffered']
    #allocation6 [shape = 's32[1]{0}', space=sflag, size = 0x4, scoped, tag = 'scoped memory for tpu_custom_call.1']
    #allocation7 [shape = 'u8[32768]{0}', space=vmem, size = 0x8000, scoped, tag = 'input window, operand 3, single buffered']
    #allocation8 [shape = 'u8[65536]{0}', space=vmem, size = 0x10000, scoped, tag = 'input window, operand 5, single buffered']
    #allocation9 [shape = 's32[1]{0}', space=sflag, size = 0x4, scoped, tag = 'scoped memory for tpu_custom_call.1']
    #allocation10 [shape = 'u8[65536]{0}', space=vmem, size = 0x10000, scoped, tag = 'input window, operand 7, single buffered']
    #allocation11 [shape = 'u8[32768]{0}', space=vmem, size = 0x8000, scoped, tag = 'input window, operand 9, single buffered']
    #allocation12 [shape = 's32[1]{0}', space=sflag, size = 0x4, scoped, tag = 'scoped memory for tpu_custom_call.1']
    #allocation13 [shape = 'u8[16384]{0}', space=vmem, size = 0x4000, scoped, tag = 'output window, operand 0']
    %16 = vsyncpa [#allocation3], 0
    %s17 = scalar_lea.sflag [#allocation3], 1
    %18 = vsyncpa %s17, 0
    %19 = vsyncpa [#allocation6], 0
    %20 = vsyncpa [#allocation9], 0
    %21 = vsyncpa [#allocation12], 0
    %22 = vsyncpa [#allocation4], 0
    %s23 = scalar_lea.sflag [#allocation4], 1
    %24 = vsyncpa %s23, 0
    loop: start=0, step=1, limit=4
    $region2: #{tpu_custom_call.1} parent=1 // loop_pre_header
      _
    $region3: #{tpu_custom_call.1} parent=1 // loop_header
      %s26 = sphi 0, %s30
      %p27 = scmp.ge.s32.totalorder %s26, 4
      %s36 = sphi 0, %s38
      %s39 = sphi 0, %s36
      %s40 = sphi 0, %s39
      %s56 = sphi 0, %s40
      %s60 = sphi 0, %s60
      %s62 = sphi 0, %s60
      %s63 = sphi 0, %s62
      %s77 = sphi 0, %s63
      %s81 = sphi 0, %s81
      %s83 = sphi 0, %s81
      %s84 = sphi 0, %s83
      %s98 = sphi 0, %s84
      %s102 = sphi 0, %s102
      %s104 = sphi 0, %s102
      %s105 = sphi 0, %s104
      %s119 = sphi 0, %s105
      %s123 = sphi 0, %s123
      %s125 = sphi 0, %s123
      %s126 = sphi 0, %s125
      %s140 = sphi 0, %s126
      %s144 = sphi 0, %s144
      %s146 = sphi 0, %s144
      %s147 = sphi 0, %s146
      %s161 = sphi 0, %s147
      %s165 = sphi 0, %s165
      %s167 = sphi 0, %s165
      %s168 = sphi 0, %s167
      %s182 = sphi 0, %s168
      %s186 = sphi 0, %s186
      %s188 = sphi 0, %s186
      %s189 = sphi 0, %s188
      %s203 = sphi 0, %s189
      %s207 = sphi 0, %s207
      %s209 = sphi 0, %s207
      %s210 = sphi 0, %s209
      %s224 = sphi 0, %s210
      %s228 = sphi 0, %s228
      %s230 = sphi 0, %s228
      %s231 = sphi 0, %s230
      %s245 = sphi 0, %s231
      %s249 = sphi 0, %s249
      %s251 = sphi 0, %s249
      %s252 = sphi 0, %s251
      %s266 = sphi 0, %s252
      %s272 = sphi 0, %s274
      %s275 = sphi 0, %s272
      %s276 = sphi 0, %s275
      %s292 = sphi 0, %s276
    $region4: #{tpu_custom_call.1} parent=1 // loop_header_branch
      %29 = sbr.rel (%p27) target = $region8
    $region5: #{tpu_custom_call.1} parent=1 // loop_body
      %s31 = ssub.s32 %s26, 1
      %s32 = ssub.s32 %s26, 2
      %s33 = sadd.s32 %s26, 1
      %s34 = ssub.s32 %s26, %s33
      %p35 = scmp.eq.s32.totalorder %s34, 0
      %s37 = sadd.s32 %s36, 1
      %s38 = scalar_select %p35, %s36, %s37
      %p41 = pneg %p35
      %p42 = scmp.eq.s32.totalorder %s26, 1
      %p43 = por %p41, %p42
      %p44 = scmp.ne.s32.totalorder %s36, %s39
      %p45 = scmp.eq.s32.totalorder %s26, 0
      %p46 = por %p44, %p45
      %p47 = scmp.ne.s32.totalorder %s36, %s39
      %p48 = scmp.eq.s32.totalorder %s31, 1
      %p49 = por %p47, %p48
      %p50 = scmp.ne.s32.totalorder %s39, %s40
      %p51 = scmp.eq.s32.totalorder %s31, 0
      %p52 = por %p50, %p51
      %p53 = scmp.ne.s32.totalorder %s39, %s40
      %p54 = scmp.eq.s32.totalorder %s32, 1
      %p55 = por %p53, %p54
      %p57 = scmp.ne.s32.totalorder %s40, %s56
      %p58 = scmp.eq.s32.totalorder %s32, 0
      %p59 = por %p57, %p58
      %s61 = sadd.s32 %s60, 1
      %p64 = scmp.eq.s32.totalorder %s26, 1
      %p65 = scmp.ne.s32.totalorder %s60, %s62
      %p66 = scmp.eq.s32.totalorder %s26, 0
      %p67 = por %p65, %p66
      %p68 = scmp.ne.s32.totalorder %s60, %s62
      %p69 = scmp.eq.s32.totalorder %s31, 1
      %p70 = por %p68, %p69
      %p71 = scmp.ne.s32.totalorder %s62, %s63
      %p72 = scmp.eq.s32.totalorder %s31, 0
      %p73 = por %p71, %p72
      %p74 = scmp.ne.s32.totalorder %s62, %s63
      %p75 = scmp.eq.s32.totalorder %s32, 1
      %p76 = por %p74, %p75
      %p78 = scmp.ne.s32.totalorder %s63, %s77
      %p79 = scmp.eq.s32.totalorder %s32, 0
      %p80 = por %p78, %p79
      %s82 = sadd.s32 %s81, 1
      %p85 = scmp.eq.s32.totalorder %s26, 1
      %p86 = scmp.ne.s32.totalorder %s81, %s83
      %p87 = scmp.eq.s32.totalorder %s26, 0
      %p88 = por %p86, %p87
      %p89 = scmp.ne.s32.totalorder %s81, %s83
      %p90 = scmp.eq.s32.totalorder %s31, 1
      %p91 = por %p89, %p90
      %p92 = scmp.ne.s32.totalorder %s83, %s84
      %p93 = scmp.eq.s32.totalorder %s31, 0
      %p94 = por %p92, %p93
      %p95 = scmp.ne.s32.totalorder %s83, %s84
      %p96 = scmp.eq.s32.totalorder %s32, 1
      %p97 = por %p95, %p96
      %p99 = scmp.ne.s32.totalorder %s84, %s98
      %p100 = scmp.eq.s32.totalorder %s32, 0
      %p101 = por %p99, %p100
      %s103 = sadd.s32 %s102, 1
      %p106 = scmp.eq.s32.totalorder %s26, 1
      %p107 = scmp.ne.s32.totalorder %s102, %s104
      %p108 = scmp.eq.s32.totalorder %s26, 0
      %p109 = por %p107, %p108
      %p110 = scmp.ne.s32.totalorder %s102, %s104
      %p111 = scmp.eq.s32.totalorder %s31, 1
      %p112 = por %p110, %p111
      %p113 = scmp.ne.s32.totalorder %s104, %s105
      %p114 = scmp.eq.s32.totalorder %s31, 0
      %p115 = por %p113, %p114
      %p116 = scmp.ne.s32.totalorder %s104, %s105
      %p117 = scmp.eq.s32.totalorder %s32, 1
      %p118 = por %p116, %p117
      %p120 = scmp.ne.s32.totalorder %s105, %s119
      %p121 = scmp.eq.s32.totalorder %s32, 0
      %p122 = por %p120, %p121
      %s124 = sadd.s32 %s123, 1
      %p127 = scmp.eq.s32.totalorder %s26, 1
      %p128 = scmp.ne.s32.totalorder %s123, %s125
      %p129 = scmp.eq.s32.totalorder %s26, 0
      %p130 = por %p128, %p129
      %p131 = scmp.ne.s32.totalorder %s123, %s125
      %p132 = scmp.eq.s32.totalorder %s31, 1
      %p133 = por %p131, %p132
      %p134 = scmp.ne.s32.totalorder %s125, %s126
      %p135 = scmp.eq.s32.totalorder %s31, 0
      %p136 = por %p134, %p135
      %p137 = scmp.ne.s32.totalorder %s125, %s126
      %p138 = scmp.eq.s32.totalorder %s32, 1
      %p139 = por %p137, %p138
      %p141 = scmp.ne.s32.totalorder %s126, %s140
      %p142 = scmp.eq.s32.totalorder %s32, 0
      %p143 = por %p141, %p142
      %s145 = sadd.s32 %s144, 1
      %p148 = scmp.eq.s32.totalorder %s26, 1
      %p149 = scmp.ne.s32.totalorder %s144, %s146
      %p150 = scmp.eq.s32.totalorder %s26, 0
      %p151 = por %p149, %p150
      %p152 = scmp.ne.s32.totalorder %s144, %s146
      %p153 = scmp.eq.s32.totalorder %s31, 1
      %p154 = por %p152, %p153
      %p155 = scmp.ne.s32.totalorder %s146, %s147
      %p156 = scmp.eq.s32.totalorder %s31, 0
      %p157 = por %p155, %p156
      %p158 = scmp.ne.s32.totalorder %s146, %s147
      %p159 = scmp.eq.s32.totalorder %s32, 1
      %p160 = por %p158, %p159
      %p162 = scmp.ne.s32.totalorder %s147, %s161
      %p163 = scmp.eq.s32.totalorder %s32, 0
      %p164 = por %p162, %p163
      %s166 = sadd.s32 %s165, 1
      %p169 = scmp.eq.s32.totalorder %s26, 1
      %p170 = scmp.ne.s32.totalorder %s165, %s167
      %p171 = scmp.eq.s32.totalorder %s26, 0
      %p172 = por %p170, %p171
      %p173 = scmp.ne.s32.totalorder %s165, %s167
      %p174 = scmp.eq.s32.totalorder %s31, 1
      %p175 = por %p173, %p174
      %p176 = scmp.ne.s32.totalorder %s167, %s168
      %p177 = scmp.eq.s32.totalorder %s31, 0
      %p178 = por %p176, %p177
      %p179 = scmp.ne.s32.totalorder %s167, %s168
      %p180 = scmp.eq.s32.totalorder %s32, 1
      %p181 = por %p179, %p180
      %p183 = scmp.ne.s32.totalorder %s168, %s182
      %p184 = scmp.eq.s32.totalorder %s32, 0
      %p185 = por %p183, %p184
      %s187 = sadd.s32 %s186, 1
      %p190 = scmp.eq.s32.totalorder %s26, 1
      %p191 = scmp.ne.s32.totalorder %s186, %s188
      %p192 = scmp.eq.s32.totalorder %s26, 0
      %p193 = por %p191, %p192
      %p194 = scmp.ne.s32.totalorder %s186, %s188
      %p195 = scmp.eq.s32.totalorder %s31, 1
      %p196 = por %p194, %p195
      %p197 = scmp.ne.s32.totalorder %s188, %s189
      %p198 = scmp.eq.s32.totalorder %s31, 0
      %p199 = por %p197, %p198
      %p200 = scmp.ne.s32.totalorder %s188, %s189
      %p201 = scmp.eq.s32.totalorder %s32, 1
      %p202 = por %p200, %p201
      %p204 = scmp.ne.s32.totalorder %s189, %s203
      %p205 = scmp.eq.s32.totalorder %s32, 0
      %p206 = por %p204, %p205
      %s208 = sadd.s32 %s207, 1
      %p211 = scmp.eq.s32.totalorder %s26, 1
      %p212 = scmp.ne.s32.totalorder %s207, %s209
      %p213 = scmp.eq.s32.totalorder %s26, 0
      %p214 = por %p212, %p213
      %p215 = scmp.ne.s32.totalorder %s207, %s209
      %p216 = scmp.eq.s32.totalorder %s31, 1
      %p217 = por %p215, %p216
      %p218 = scmp.ne.s32.totalorder %s209, %s210
      %p219 = scmp.eq.s32.totalorder %s31, 0
      %p220 = por %p218, %p219
      %p221 = scmp.ne.s32.totalorder %s209, %s210
      %p222 = scmp.eq.s32.totalorder %s32, 1
      %p223 = por %p221, %p222
      %p225 = scmp.ne.s32.totalorder %s210, %s224
      %p226 = scmp.eq.s32.totalorder %s32, 0
      %p227 = por %p225, %p226
      %s229 = sadd.s32 %s228, 1
      %p232 = scmp.eq.s32.totalorder %s26, 1
      %p233 = scmp.ne.s32.totalorder %s228, %s230
      %p234 = scmp.eq.s32.totalorder %s26, 0
      %p235 = por %p233, %p234
      %p236 = scmp.ne.s32.totalorder %s228, %s230
      %p237 = scmp.eq.s32.totalorder %s31, 1
      %p238 = por %p236, %p237
      %p239 = scmp.ne.s32.totalorder %s230, %s231
      %p240 = scmp.eq.s32.totalorder %s31, 0
      %p241 = por %p239, %p240
      %p242 = scmp.ne.s32.totalorder %s230, %s231
      %p243 = scmp.eq.s32.totalorder %s32, 1
      %p244 = por %p242, %p243
      %p246 = scmp.ne.s32.totalorder %s231, %s245
      %p247 = scmp.eq.s32.totalorder %s32, 0
      %p248 = por %p246, %p247
      %s250 = sadd.s32 %s249, 1
      %p253 = scmp.eq.s32.totalorder %s26, 1
      %p254 = scmp.ne.s32.totalorder %s249, %s251
      %p255 = scmp.eq.s32.totalorder %s26, 0
      %p256 = por %p254, %p255
      %p257 = scmp.ne.s32.totalorder %s249, %s251
      %p258 = scmp.eq.s32.totalorder %s31, 1
      %p259 = por %p257, %p258
      %p260 = scmp.ne.s32.totalorder %s251, %s252
      %p261 = scmp.eq.s32.totalorder %s31, 0
      %p262 = por %p260, %p261
      %p263 = scmp.ne.s32.totalorder %s251, %s252
      %p264 = scmp.eq.s32.totalorder %s32, 1
      %p265 = por %p263, %p264
      %p267 = scmp.ne.s32.totalorder %s252, %s266
      %p268 = scmp.eq.s32.totalorder %s32, 0
      %p269 = por %p267, %p268
      %s270 = ssub.s32 %s26, %s33
      %p271 = scmp.eq.s32.totalorder %s270, 0
      %s273 = sadd.s32 %s272, 1
      %s274 = scalar_select %p271, %s272, %s273
      %p277 = pneg %p271
      %p278 = scmp.eq.s32.totalorder %s26, 1
      %p279 = por %p277, %p278
      %p280 = scmp.ne.s32.totalorder %s272, %s275
      %p281 = scmp.eq.s32.totalorder %s26, 0
      %p282 = por %p280, %p281
      %p283 = scmp.ne.s32.totalorder %s272, %s275
      %p284 = scmp.eq.s32.totalorder %s31, 1
      %p285 = por %p283, %p284
      %p286 = scmp.ne.s32.totalorder %s275, %s276
      %p287 = scmp.eq.s32.totalorder %s31, 0
      %p288 = por %p286, %p287
      %p289 = scmp.ne.s32.totalorder %s275, %s276
      %p290 = scmp.eq.s32.totalorder %s32, 1
      %p291 = por %p289, %p290
      %p293 = scmp.ne.s32.totalorder %s276, %s292
      %p294 = scmp.eq.s32.totalorder %s32, 0
      %p295 = por %p293, %p294
      %p296 = scmp.le.s32.totalorder 1, %s26
      %p297 = scmp.lt.s32.totalorder %s26, 3
      %p298 = pnand %p296, %p297
      %p299 = pneg %p298
      // Predicated region
      $region9: #{tpu_custom_call.1} parent=5 // pred_check
        _
      $region10: #{tpu_custom_call.1} parent=5 // pred_check_branch
        %301 = sbr.rel (%p298) target = $region12
      $region11: #{tpu_custom_call.1} parent=5 // pred_region
        %s302 = ssub.s32 %s26, 1
        // Predicated region
        $region13: #{tpu_custom_call.1} parent=11 // pred_check
          %p303 = pneg %p73
        $region14: #{tpu_custom_call.1} parent=11 // pred_check_branch
          %305 = sbr.rel (%p303) target = $region16
        $region15: #{tpu_custom_call.1} parent=11 // pred_region
          %s307 = ssub.s32 2048, 2048
          %308 = vsyncadd [#allocation6], %s307
          %s309 = sshll.u32 [#allocation5], 4
          %s310 = int_to_ptr.vmem [resolvable:$true] %s309
          %315 = dma.hbm_to_vmem [thread:$0]  %s1, 2048, %s310, [#allocation6], 64, 64, 4
        $region16: #{tpu_custom_call.1} parent=11 // pred_fallthru
          _
        // Predicated region
        $region17: #{tpu_custom_call.1} parent=11 // pred_check
          %p316 = pneg %p94
        $region18: #{tpu_custom_call.1} parent=11 // pred_check_branch
          %318 = sbr.rel (%p316) target = $region20
        $region19: #{tpu_custom_call.1} parent=11 // pred_region
          _
        $region20: #{tpu_custom_call.1} parent=11 // pred_fallthru
          _
        // Predicated region
        $region21: #{tpu_custom_call.1} parent=11 // pred_check
          %p319 = pneg %p115
        $region22: #{tpu_custom_call.1} parent=11 // pred_check_branch
          %321 = sbr.rel (%p319) target = $region24
        $region23: #{tpu_custom_call.1} parent=11 // pred_region
          %s323 = ssub.s32 1024, 1024
          %324 = vsyncadd [#allocation6], %s323
          %s325 = sshll.u32 [#allocation7], 4
          %s326 = int_to_ptr.vmem [resolvable:$true] %s325
          %331 = dma.hbm_to_vmem [thread:$0]  %s3, 1024, %s326, [#allocation6], 64, 64, 4
        $region24: #{tpu_custom_call.1} parent=11 // pred_fallthru
          _
        // Predicated region
        $region25: #{tpu_custom_call.1} parent=11 // pred_check
          %p332 = pneg %p136
        $region26: #{tpu_custom_call.1} parent=11 // pred_check_branch
          %334 = sbr.rel (%p332) target = $region28
        $region27: #{tpu_custom_call.1} parent=11 // pred_region
          _
        $region28: #{tpu_custom_call.1} parent=11 // pred_fallthru
          _
        // Predicated region
        $region29: #{tpu_custom_call.1} parent=11 // pred_check
          %p335 = pneg %p157
        $region30: #{tpu_custom_call.1} parent=11 // pred_check_branch
          %337 = sbr.rel (%p335) target = $region32
        $region31: #{tpu_custom_call.1} parent=11 // pred_region
          %s339 = ssub.s32 2048, 2048
          %340 = vsyncadd [#allocation9], %s339
          %s341 = sshll.u32 [#allocation8], 4
          %s342 = int_to_ptr.vmem [resolvable:$true] %s341
          %347 = dma.hbm_to_vmem [thread:$0]  %s5, 2048, %s342, [#allocation9], 64, 64, 4
        $region32: #{tpu_custom_call.1} parent=11 // pred_fallthru
          _
        // Predicated region
        $region33: #{tpu_custom_call.1} parent=11 // pred_check
          %p348 = pneg %p178
        $region34: #{tpu_custom_call.1} parent=11 // pred_check_branch
          %350 = sbr.rel (%p348) target = $region36
        $region35: #{tpu_custom_call.1} parent=11 // pred_region
          _
        $region36: #{tpu_custom_call.1} parent=11 // pred_fallthru
          _
        // Predicated region
        $region37: #{tpu_custom_call.1} parent=11 // pred_check
          %p351 = pneg %p199
        $region38: #{tpu_custom_call.1} parent=11 // pred_check_branch
          %353 = sbr.rel (%p351) target = $region40
        $region39: #{tpu_custom_call.1} parent=11 // pred_region
          %s355 = ssub.s32 2048, 2048
          %356 = vsyncadd [#allocation9], %s355
          %s357 = sshll.u32 [#allocation10], 4
          %s358 = int_to_ptr.vmem [resolvable:$true] %s357
          %363 = dma.hbm_to_vmem [thread:$0]  %s7, 2048, %s358, [#allocation9], 64, 64, 4
        $region40: #{tpu_custom_call.1} parent=11 // pred_fallthru
          _
        // Predicated region
        $region41: #{tpu_custom_call.1} parent=11 // pred_check
          %p364 = pneg %p220
        $region42: #{tpu_custom_call.1} parent=11 // pred_check_branch
          %366 = sbr.rel (%p364) target = $region44
        $region43: #{tpu_custom_call.1} parent=11 // pred_region
          _
        $region44: #{tpu_custom_call.1} parent=11 // pred_fallthru
          _
        // Predicated region
        $region45: #{tpu_custom_call.1} parent=11 // pred_check
          %p367 = pneg %p241
        $region46: #{tpu_custom_call.1} parent=11 // pred_check_branch
          %369 = sbr.rel (%p367) target = $region48
        $region47: #{tpu_custom_call.1} parent=11 // pred_region
          %s371 = ssub.s32 1024, 1024
          %372 = vsyncadd [#allocation12], %s371
          %s373 = sshll.u32 [#allocation11], 4
          %s374 = int_to_ptr.vmem [resolvable:$true] %s373
          %379 = dma.hbm_to_vmem [thread:$0]  %s9, 1024, %s374, [#allocation12], 64, 64, 4
        $region48: #{tpu_custom_call.1} parent=11 // pred_fallthru
          _
        // Predicated region
        $region49: #{tpu_custom_call.1} parent=11 // pred_check
          %p380 = pneg %p262
        $region50: #{tpu_custom_call.1} parent=11 // pred_check_branch
          %382 = sbr.rel (%p380) target = $region52
        $region51: #{tpu_custom_call.1} parent=11 // pred_region
          _
        $region52: #{tpu_custom_call.1} parent=11 // pred_fallthru
          _
      $region12: #{tpu_custom_call.1} parent=5 // pred_fallthru
        _
      %p383 = scmp.lt.s32.totalorder %s26, 2
      // Predicated region
      $region53: #{tpu_custom_call.1} parent=5 // pred_check
        %p384 = pneg %p383
      $region54: #{tpu_custom_call.1} parent=5 // pred_check_branch
        %386 = sbr.rel (%p384) target = $region56
      $region55: #{tpu_custom_call.1} parent=5 // pred_region
        // Predicated region
        $region57: #{tpu_custom_call.1} parent=55 // pred_check
          %p387 = pneg %p46
        $region58: #{tpu_custom_call.1} parent=55 // pred_check_branch
          %389 = sbr.rel (%p387) target = $region60
        $region59: #{tpu_custom_call.1} parent=55 // pred_region
          %s390 = sand.u32 %s36, 1
          %s391 = scalar_lea.sflag [#allocation3], %s390
          %s392 = sand.u32 %s36, 1
          %s393 = smul.addr %s392, 8
          %s394 = scalar_lea.vmem [#allocation2], %s393
          %s396 = ssub.s32 128, 128
          %397 = vsyncadd %s391, %s396
          %s398 = smul.addr %s26, 2
          %s399 = smul.addr %s398, 64
          %s400 = scalar_lea.hbm %s0, %s399
          %s401 = sshll.u32 %s394, 4
          %s402 = int_to_ptr.vmem [resolvable:$true] %s401
          %407 = dma.hbm_to_vmem [thread:$0]  %s400, 128, %s402, %s391, 64, 64, 4
        $region60: #{tpu_custom_call.1} parent=55 // pred_fallthru
          _
      $region56: #{tpu_custom_call.1} parent=5 // pred_fallthru
        _
      %p408 = scmp.le.s32.totalorder 1, %s26
      %p409 = scmp.lt.s32.totalorder %s26, 3
      %p410 = pnand %p408, %p409
      %p411 = pneg %p410
      // Predicated region
      $region61: #{tpu_custom_call.1} parent=5 // pred_check
        _
      $region62: #{tpu_custom_call.1} parent=5 // pred_check_branch
        %413 = sbr.rel (%p410) target = $region64
      $region63: #{tpu_custom_call.1} parent=5 // pred_region
        %s414 = ssub.s32 %s26, 1
        %s415 = sand.u32 %s39, 1
        %s416 = scalar_lea.sflag [#allocation3], %s415
        %s417 = sand.u32 %s39, 1
        %s418 = smul.addr %s417, 8
        %s419 = scalar_lea.vmem [#allocation2], %s418
        // Predicated region
        $region65: #{tpu_custom_call.1} parent=63 // pred_check
          %p420 = pneg %p52
        $region66: #{tpu_custom_call.1} parent=63 // pred_check_branch
          %422 = sbr.rel (%p420) target = $region68
        $region67: #{tpu_custom_call.1} parent=63 // pred_region
          %423 = dma.done %s416, 128
        $region68: #{tpu_custom_call.1} parent=63 // pred_fallthru
          _
        // Predicated region
        $region69: #{tpu_custom_call.1} parent=63 // pred_check
          %p424 = pneg %p73
        $region70: #{tpu_custom_call.1} parent=63 // pred_check_branch
          %426 = sbr.rel (%p424) target = $region72
        $region71: #{tpu_custom_call.1} parent=63 // pred_region
          %427 = dma.done [#allocation6], 2048
        $region72: #{tpu_custom_call.1} parent=63 // pred_fallthru
          _
        // Predicated region
        $region73: #{tpu_custom_call.1} parent=63 // pred_check
          %p428 = pneg %p115
        $region74: #{tpu_custom_call.1} parent=63 // pred_check_branch
          %430 = sbr.rel (%p428) target = $region76
        $region75: #{tpu_custom_call.1} parent=63 // pred_region
          %431 = dma.done [#allocation6], 1024
        $region76: #{tpu_custom_call.1} parent=63 // pred_fallthru
          _
        // Predicated region
        $region77: #{tpu_custom_call.1} parent=63 // pred_check
          %p432 = pneg %p157
        $region78: #{tpu_custom_call.1} parent=63 // pred_check_branch
          %434 = sbr.rel (%p432) target = $region80
        $region79: #{tpu_custom_call.1} parent=63 // pred_region
          %435 = dma.done [#allocation9], 2048
        $region80: #{tpu_custom_call.1} parent=63 // pred_fallthru
          _
        // Predicated region
        $region81: #{tpu_custom_call.1} parent=63 // pred_check
          %p436 = pneg %p199
        $region82: #{tpu_custom_call.1} parent=63 // pred_check_branch
          %438 = sbr.rel (%p436) target = $region84
        $region83: #{tpu_custom_call.1} parent=63 // pred_region
          %439 = dma.done [#allocation9], 2048
        $region84: #{tpu_custom_call.1} parent=63 // pred_fallthru
          _
        // Predicated region
        $region85: #{tpu_custom_call.1} parent=63 // pred_check
          %p440 = pneg %p241
        $region86: #{tpu_custom_call.1} parent=63 // pred_check_branch
          %442 = sbr.rel (%p440) target = $region88
        $region87: #{tpu_custom_call.1} parent=63 // pred_region
          %443 = dma.done [#allocation12], 1024
        $region88: #{tpu_custom_call.1} parent=63 // pred_fallthru
          _
        %s444 = sand.u32 %s39, 1
        %s445 = scalar_lea.sflag [#allocation3], %s444
        %s446 = sand.u32 %s39, 1
        %s447 = smul.addr %s446, 8
        %s448 = scalar_lea.vmem [#allocation2], %s447
        %p449 = pneg %p52
        %p450 = pneg %p49
        %p451 = pneg %p73
        %p452 = pneg %p70
        %p453 = pneg %p94
        %p454 = pneg %p91
        %p455 = pneg %p115
        %p456 = pneg %p112
        %p457 = pneg %p136
        %p458 = pneg %p133
        %p459 = pneg %p157
        %p460 = pneg %p154
        %p461 = pneg %p178
        %p462 = pneg %p175
        %p463 = pneg %p199
        %p464 = pneg %p196
        %p465 = pneg %p220
        %p466 = pneg %p217
        %p467 = pneg %p241
        %p468 = pneg %p238
        %p469 = pneg %p262
        %p470 = pneg %p259
        %p471 = pneg %p288
        %p472 = pneg %p285
        %s473 = sand.u32 %s275, 1
        %s474 = scalar_lea.sflag [#allocation4], %s473
        %s475 = sand.u32 %s275, 1
        %s476 = smul.addr %s475, 16
        %s477 = scalar_lea.vmem [#allocation13], %s476
        %v479 = vld [vmem:[%s419] sm:$0xf]
        %v480 = vld [vmem:[%s419 + $0x4] sm:$0xf]
        %v481 = vunpack.c.l.bf16 %v479
        %v482 = vunpack.c.l.bf16 %v480
        %v483 = vlaneseq
        %v484 = vshrl.u32 %v483, 7
        %v485 = vadd.s32 %v484, 8
        %v486 = vrot.slane %v481, 7
        %v487 = vrot.slane %v482, 7
        %vm488 = vcmp.lt.s32.totalorder %v484, 1
        %v489 = vsel %vm488, %v486, %v487
        %v490 = vsel %vm488, %v487, %v486
        %vm491 = vcmp.ge.s32.totalorder %v484, 1
        %vm492 = vcmp.ge.s32.totalorder %v485, 1
        %v493 = vsel %vm491, %v490, 0.0
        %v494 = vsel %vm492, %v489, 0.0
        %v495 = vpack.c.bf16 %v494, %v493
        %v496 = vpack.c.bf16 %v482, %v481
        %v497 = vld [vmem:[#allocation5] sm:$0xf]
        %v498 = vld [vmem:[#allocation5 + $0x4] sm:$0xf]
        %v499 = vld [vmem:[#allocation5 + $0x8] sm:$0xf]
        %v500 = vld [vmem:[#allocation5 + $0xc] sm:$0xf]
        %v501 = vld [vmem:[#allocation5 + $0x10] sm:$0xf]
        %v502 = vld [vmem:[#allocation5 + $0x14] sm:$0xf]
        %v503 = vld [vmem:[#allocation5 + $0x18] sm:$0xf]
        %v504 = vld [vmem:[#allocation5 + $0x1c] sm:$0xf]
        %v505 = vld [vmem:[#allocation5 + $0x20] sm:$0xf]
        %v506 = vld [vmem:[#allocation5 + $0x24] sm:$0xf]
        %v507 = vld [vmem:[#allocation5 + $0x28] sm:$0xf]
        %v508 = vld [vmem:[#allocation5 + $0x2c] sm:$0xf]
        %v509 = vld [vmem:[#allocation5 + $0x30] sm:$0xf]
        %v510 = vld [vmem:[#allocation5 + $0x34] sm:$0xf]
        %v511 = vld [vmem:[#allocation5 + $0x38] sm:$0xf]
        %v512 = vld [vmem:[#allocation5 + $0x3c] sm:$0xf]
        %v513 = vld [vmem:[#allocation5 + $0x40] sm:$0xf]
        %v514 = vld [vmem:[#allocation5 + $0x44] sm:$0xf]
        %v515 = vld [vmem:[#allocation5 + $0x48] sm:$0xf]
        %v516 = vld [vmem:[#allocation5 + $0x4c] sm:$0xf]
        %v517 = vld [vmem:[#allocation5 + $0x50] sm:$0xf]
        %v518 = vld [vmem:[#allocation5 + $0x54] sm:$0xf]
        %v519 = vld [vmem:[#allocation5 + $0x58] sm:$0xf]
        %v520 = vld [vmem:[#allocation5 + $0x5c] sm:$0xf]
        %v521 = vld [vmem:[#allocation5 + $0x60] sm:$0xf]
        %v522 = vld [vmem:[#allocation5 + $0x64] sm:$0xf]
        %v523 = vld [vmem:[#allocation5 + $0x68] sm:$0xf]
        %v524 = vld [vmem:[#allocation5 + $0x6c] sm:$0xf]
        %v525 = vld [vmem:[#allocation5 + $0x70] sm:$0xf]
        %v526 = vld [vmem:[#allocation5 + $0x74] sm:$0xf]
        %v527 = vld [vmem:[#allocation5 + $0x78] sm:$0xf]
        %v528 = vld [vmem:[#allocation5 + $0x7c] sm:$0xf]
        %v529 = vld [vmem:[%s2] sm:$0x1]
        %v531 = vlaneseq
        %v532 = vshrl.u32 %v531, 7
        %v533 = vsub.s32 0, %v532
        %v534 = vrot.slane %v529, %v533
        %v568 = vunpack.c.l.b16 %v497
        %v569 = vunpack.c.l.b16 %v498
        %v570 = vunpack.c.l.b16 %v499
        %v571 = vunpack.c.l.b16 %v500
        %v572 = vunpack.c.l.b16 %v501
        %v573 = vunpack.c.l.b16 %v502
        %v574 = vunpack.c.l.b16 %v503
        %v575 = vunpack.c.l.b16 %v504
        %v576 = vunpack.c.l.b16 %v505
        %v577 = vunpack.c.l.b16 %v506
        %v578 = vunpack.c.l.b16 %v507
        %v579 = vunpack.c.l.b16 %v508
        %v580 = vunpack.c.l.b16 %v509
        %v581 = vunpack.c.l.b16 %v510
        %v582 = vunpack.c.l.b16 %v511
        %v583 = vunpack.c.l.b16 %v512
        %v584 = vunpack.c.l.b16 %v513
        %v585 = vunpack.c.l.b16 %v514
        %v586 = vunpack.c.l.b16 %v515
        %v587 = vunpack.c.l.b16 %v516
        %v588 = vunpack.c.l.b16 %v517
        %v589 = vunpack.c.l.b16 %v518
        %v590 = vunpack.c.l.b16 %v519
        %v591 = vunpack.c.l.b16 %v520
        %v592 = vunpack.c.l.b16 %v521
        %v593 = vunpack.c.l.b16 %v522
        %v594 = vunpack.c.l.b16 %v523
        %v595 = vunpack.c.l.b16 %v524
        %v596 = vunpack.c.l.b16 %v525
        %v597 = vunpack.c.l.b16 %v526
        %v598 = vunpack.c.l.b16 %v527
        %v599 = vunpack.c.l.b16 %v528
        %v600 = vpack.c.b16 %v569, %v568
        %v601 = vpack.c.b16 %v571, %v570
        %v602 = vpack.c.b16 %v573, %v572
        %v603 = vpack.c.b16 %v575, %v574
        %v604 = vpack.c.b16 %v577, %v576
        %v605 = vpack.c.b16 %v579, %v578
        %v606 = vpack.c.b16 %v581, %v580
        %v607 = vpack.c.b16 %v583, %v582
        %v608 = vpack.c.b16 %v585, %v584
        %v609 = vpack.c.b16 %v587, %v586
        %v610 = vpack.c.b16 %v589, %v588
        %v611 = vpack.c.b16 %v591, %v590
        %v612 = vpack.c.b16 %v593, %v592
        %v613 = vpack.c.b16 %v595, %v594
        %v614 = vpack.c.b16 %v597, %v596
        %v615 = vpack.c.b16 %v599, %v598
        %632 = vmatprep.subr.bf16.mxu0 0
        %633 = vmatpush1.bf16.msra.mxu0 %v600
        %634 = vmatprep.subr.bf16.mxu0 0
        %635 = vmatpush1.bf16.msra.mxu0 %v601
        %636 = vmatprep.subr.bf16.mxu0 0
        %637 = vmatpush1.bf16.msra.mxu0 %v602
        %638 = vmatprep.subr.bf16.mxu0 0
        %639 = vmatpush1.bf16.msra.mxu0 %v603
        %640 = vmatprep.subr.bf16.mxu0 0
        %641 = vmatpush1.bf16.msra.mxu0 %v604
        %642 = vmatprep.subr.bf16.mxu0 0
        %643 = vmatpush1.bf16.msra.mxu0 %v605
        %644 = vmatprep.subr.bf16.mxu0 0
        %645 = vmatpush1.bf16.msra.mxu0 %v606
        %646 = vmatprep.subr.bf16.mxu0 0
        %647 = vmatpush1.bf16.msra.mxu0 %v607
        %648 = vmatprep.subr.bf16.mxu0 0
        %649 = vmatpush1.bf16.msra.mxu0 %v608
        %650 = vmatprep.subr.bf16.mxu0 0
        %651 = vmatpush1.bf16.msra.mxu0 %v609
        %652 = vmatprep.subr.bf16.mxu0 0
        %653 = vmatpush1.bf16.msra.mxu0 %v610
        %654 = vmatprep.subr.bf16.mxu0 0
        %655 = vmatpush1.bf16.msra.mxu0 %v611
        %656 = vmatprep.subr.bf16.mxu0 0
        %657 = vmatpush1.bf16.msra.mxu0 %v612
        %658 = vmatprep.subr.bf16.mxu0 0
        %659 = vmatpush1.bf16.msra.mxu0 %v613
        %660 = vmatprep.subr.bf16.mxu0 0
        %661 = vmatpush1.bf16.msra.mxu0 %v614
        %662 = vmatprep.subr.bf16.mxu0 0
        %663 = vmatpush1.bf16.msra.mxu0 %v615
        %664 = vmatprep.mubr.bf16.mxu0 %v496
        %665 = vmatmul.mubr.bf16.gmra.mrb[0].mxu0 %v495
        %v666 = vpop.f32.mrb[0].mxu0
        %v667 = vadd.f32 %v534, %v666
        %v668 = vpop.f32.mrb[0].mxu0
        %v669 = vpop.f32.mrb[0].mxu0
        %v670 = vadd.f32 %v534, %v669
        %v671 = vpop.f32.mrb[0].mxu0
        %672 = vdwg.mxu0
        %v673 = vmax.f32 %v667, 0.0
        %v674 = vmax.f32 %v670, 0.0
        %v675 = vld [vmem:[#allocation7] sm:$0xf]
        %v676 = vld [vmem:[#allocation7 + $0x4] sm:$0xf]
        %v677 = vld [vmem:[#allocation7 + $0x8] sm:$0xf]
        %v678 = vld [vmem:[#allocation7 + $0xc] sm:$0xf]
        %v679 = vld [vmem:[#allocation7 + $0x10] sm:$0xf]
        %v680 = vld [vmem:[#allocation7 + $0x14] sm:$0xf]
        %v681 = vld [vmem:[#allocation7 + $0x18] sm:$0xf]
        %v682 = vld [vmem:[#allocation7 + $0x1c] sm:$0xf]
        %v683 = vld [vmem:[#allocation7 + $0x20] sm:$0xf]
        %v684 = vld [vmem:[#allocation7 + $0x24] sm:$0xf]
        %v685 = vld [vmem:[#allocation7 + $0x28] sm:$0xf]
        %v686 = vld [vmem:[#allocation7 + $0x2c] sm:$0xf]
        %v687 = vld [vmem:[#allocation7 + $0x30] sm:$0xf]
        %v688 = vld [vmem:[#allocation7 + $0x34] sm:$0xf]
        %v689 = vld [vmem:[#allocation7 + $0x38] sm:$0xf]
        %v690 = vld [vmem:[#allocation7 + $0x3c] sm:$0xf]
        %v691 = vld [vmem:[%s4] sm:$0x1]
        %v693 = vlaneseq
        %v694 = vshrl.u32 %v693, 7
        %v695 = vsub.s32 0, %v694
        %v696 = vrot.slane %v691, %v695
        %v700 = vunpack.c.l.b16 %v479
        %v701 = vunpack.c.l.b16 %v480
        %v702 = vpack.c.b16 %v701, %v700
        %v720 = vunpack.c.l.b16 %v675
        %v721 = vunpack.c.l.b16 %v676
        %v722 = vunpack.c.l.b16 %v677
        %v723 = vunpack.c.l.b16 %v678
        %v724 = vunpack.c.l.b16 %v679
        %v725 = vunpack.c.l.b16 %v680
        %v726 = vunpack.c.l.b16 %v681
        %v727 = vunpack.c.l.b16 %v682
        %v728 = vunpack.c.l.b16 %v683
        %v729 = vunpack.c.l.b16 %v684
        %v730 = vunpack.c.l.b16 %v685
        %v731 = vunpack.c.l.b16 %v686
        %v732 = vunpack.c.l.b16 %v687
        %v733 = vunpack.c.l.b16 %v688
        %v734 = vunpack.c.l.b16 %v689
        %v735 = vunpack.c.l.b16 %v690
        %v736 = vpack.c.b16 %v721, %v720
        %v737 = vpack.c.b16 %v723, %v722
        %v738 = vpack.c.b16 %v725, %v724
        %v739 = vpack.c.b16 %v727, %v726
        %v740 = vpack.c.b16 %v729, %v728
        %v741 = vpack.c.b16 %v731, %v730
        %v742 = vpack.c.b16 %v733, %v732
        %v743 = vpack.c.b16 %v735, %v734
        %752 = vmatprep.subr.bf16.mxu0 0
        %753 = vmatpush1.bf16.msra.mxu0 %v736
        %754 = vmatprep.subr.bf16.mxu0 0
        %755 = vmatpush1.bf16.msra.mxu0 %v737
        %756 = vmatprep.subr.bf16.mxu0 0
        %757 = vmatpush1.bf16.msra.mxu0 %v738
        %758 = vmatprep.subr.bf16.mxu0 0
        %759 = vmatpush1.bf16.msra.mxu0 %v739
        %760 = vmatprep.subr.bf16.mxu0 0
        %761 = vmatpush1.bf16.msra.mxu0 %v740
        %762 = vmatprep.subr.bf16.mxu0 0
        %763 = vmatpush1.bf16.msra.mxu0 %v741
        %764 = vmatprep.subr.bf16.mxu0 0
        %765 = vmatpush1.bf16.msra.mxu0 %v742
        %766 = vmatprep.subr.bf16.mxu0 0
        %767 = vmatpush1.bf16.msra.mxu0 %v743
        %768 = vmatprep.subr.bf16.mxu0 0
        %769 = vmatpush1.bf16.msra.mxu0 0
        %770 = vmatprep.subr.bf16.mxu0 0
        %771 = vmatpush1.bf16.msra.mxu0 0
        %772 = vmatprep.subr.bf16.mxu0 0
        %773 = vmatpush1.bf16.msra.mxu0 0
        %774 = vmatprep.subr.bf16.mxu0 0
        %775 = vmatpush1.bf16.msra.mxu0 0
        %776 = vmatprep.subr.bf16.mxu0 0
        %777 = vmatpush1.bf16.msra.mxu0 0
        %778 = vmatprep.subr.bf16.mxu0 0
        %779 = vmatpush1.bf16.msra.mxu0 0
        %780 = vmatprep.subr.bf16.mxu0 0
        %781 = vmatpush1.bf16.msra.mxu0 0
        %782 = vmatprep.subr.bf16.mxu0 0
        %783 = vmatpush1.bf16.msra.mxu0 0
        %784 = vmatprep.mubr.bf16.mxu0 0
        %785 = vmatmul.mubr.bf16.gmra.mrb[0].mxu0 %v702
        %v786 = vpop.f32.mrb[0].mxu0
        %v787 = vadd.f32 %v696, %v786
        %v788 = vpop.f32.mrb[0].mxu0
        %v789 = vpop.f32.mrb[0].mxu0
        %v790 = vadd.f32 %v696, %v789
        %v791 = vpop.f32.mrb[0].mxu0
        %792 = vdwg.mxu0
        %v793 = vadd.f32 %v673, %v787
        %v794 = vadd.f32 %v674, %v790
        %v795 = vmax.f32 %v793, 0.0
        %v796 = vmax.f32 %v794, 0.0
        %v797 = vrot.slane %v795, 6
        %v798 = vrot.slane %v796, 6
        %vm799 = vcmp.lt.s32.totalorder %v484, 2
        %v800 = vsel %vm799, %v797, %v798
        %v801 = vsel %vm799, %v798, %v797
        %vm802 = vcmp.ge.s32.totalorder %v484, 2
        %vm803 = vcmp.ge.s32.totalorder %v485, 2
        %v804 = vsel %vm802, %v801, 0.0
        %v805 = vsel %vm803, %v800, 0.0
        %v806 = vpack.c.bf16 %v805, %v804
        %v807 = vpack.c.bf16 %v796, %v795
        %v808 = vld [vmem:[#allocation8] sm:$0xf]
        %v809 = vld [vmem:[#allocation8 + $0x4] sm:$0xf]
        %v810 = vld [vmem:[#allocation8 + $0x8] sm:$0xf]
        %v811 = vld [vmem:[#allocation8 + $0xc] sm:$0xf]
        %v812 = vld [vmem:[#allocation8 + $0x10] sm:$0xf]
        %v813 = vld [vmem:[#allocation8 + $0x14] sm:$0xf]
        %v814 = vld [vmem:[#allocation8 + $0x18] sm:$0xf]
        %v815 = vld [vmem:[#allocation8 + $0x1c] sm:$0xf]
        %v816 = vld [vmem:[#allocation8 + $0x20] sm:$0xf]
        %v817 = vld [vmem:[#allocation8 + $0x24] sm:$0xf]
        %v818 = vld [vmem:[#allocation8 + $0x28] sm:$0xf]
        %v819 = vld [vmem:[#allocation8 + $0x2c] sm:$0xf]
        %v820 = vld [vmem:[#allocation8 + $0x30] sm:$0xf]
        %v821 = vld [vmem:[#allocation8 + $0x34] sm:$0xf]
        %v822 = vld [vmem:[#allocation8 + $0x38] sm:$0xf]
        %v823 = vld [vmem:[#allocation8 + $0x3c] sm:$0xf]
        %v824 = vld [vmem:[#allocation8 + $0x40] sm:$0xf]
        %v825 = vld [vmem:[#allocation8 + $0x44] sm:$0xf]
        %v826 = vld [vmem:[#allocation8 + $0x48] sm:$0xf]
        %v827 = vld [vmem:[#allocation8 + $0x4c] sm:$0xf]
        %v828 = vld [vmem:[#allocation8 + $0x50] sm:$0xf]
        %v829 = vld [vmem:[#allocation8 + $0x54] sm:$0xf]
        %v830 = vld [vmem:[#allocation8 + $0x58] sm:$0xf]
        %v831 = vld [vmem:[#allocation8 + $0x5c] sm:$0xf]
        %v832 = vld [vmem:[#allocation8 + $0x60] sm:$0xf]
        %v833 = vld [vmem:[#allocation8 + $0x64] sm:$0xf]
        %v834 = vld [vmem:[#allocation8 + $0x68] sm:$0xf]
        %v835 = vld [vmem:[#allocation8 + $0x6c] sm:$0xf]
        %v836 = vld [vmem:[#allocation8 + $0x70] sm:$0xf]
        %v837 = vld [vmem:[#allocation8 + $0x74] sm:$0xf]
        %v838 = vld [vmem:[#allocation8 + $0x78] sm:$0xf]
        %v839 = vld [vmem:[#allocation8 + $0x7c] sm:$0xf]
        %v840 = vld [vmem:[%s6] sm:$0x1]
        %v842 = vlaneseq
        %v843 = vshrl.u32 %v842, 7
        %v844 = vsub.s32 0, %v843
        %v845 = vrot.slane %v840, %v844
        %v879 = vunpack.c.l.b16 %v808
        %v880 = vunpack.c.l.b16 %v809
        %v881 = vunpack.c.l.b16 %v810
        %v882 = vunpack.c.l.b16 %v811
        %v883 = vunpack.c.l.b16 %v812
        %v884 = vunpack.c.l.b16 %v813
        %v885 = vunpack.c.l.b16 %v814
        %v886 = vunpack.c.l.b16 %v815
        %v887 = vunpack.c.l.b16 %v816
        %v888 = vunpack.c.l.b16 %v817
        %v889 = vunpack.c.l.b16 %v818
        %v890 = vunpack.c.l.b16 %v819
        %v891 = vunpack.c.l.b16 %v820
        %v892 = vunpack.c.l.b16 %v821
        %v893 = vunpack.c.l.b16 %v822
        %v894 = vunpack.c.l.b16 %v823
        %v895 = vunpack.c.l.b16 %v824
        %v896 = vunpack.c.l.b16 %v825
        %v897 = vunpack.c.l.b16 %v826
        %v898 = vunpack.c.l.b16 %v827
        %v899 = vunpack.c.l.b16 %v828
        %v900 = vunpack.c.l.b16 %v829
        %v901 = vunpack.c.l.b16 %v830
        %v902 = vunpack.c.l.b16 %v831
        %v903 = vunpack.c.l.b16 %v832
        %v904 = vunpack.c.l.b16 %v833
        %v905 = vunpack.c.l.b16 %v834
        %v906 = vunpack.c.l.b16 %v835
        %v907 = vunpack.c.l.b16 %v836
        %v908 = vunpack.c.l.b16 %v837
        %v909 = vunpack.c.l.b16 %v838
        %v910 = vunpack.c.l.b16 %v839
        %v911 = vpack.c.b16 %v880, %v879
        %v912 = vpack.c.b16 %v882, %v881
        %v913 = vpack.c.b16 %v884, %v883
        %v914 = vpack.c.b16 %v886, %v885
        %v915 = vpack.c.b16 %v888, %v887
        %v916 = vpack.c.b16 %v890, %v889
        %v917 = vpack.c.b16 %v892, %v891
        %v918 = vpack.c.b16 %v894, %v893
        %v919 = vpack.c.b16 %v896, %v895
        %v920 = vpack.c.b16 %v898, %v897
        %v921 = vpack.c.b16 %v900, %v899
        %v922 = vpack.c.b16 %v902, %v901
        %v923 = vpack.c.b16 %v904, %v903
        %v924 = vpack.c.b16 %v906, %v905
        %v925 = vpack.c.b16 %v908, %v907
        %v926 = vpack.c.b16 %v910, %v909
        %943 = vmatprep.subr.bf16.mxu0 0
        %944 = vmatpush1.bf16.msra.mxu0 %v911
        %945 = vmatprep.subr.bf16.mxu0 0
        %946 = vmatpush1.bf16.msra.mxu0 %v912
        %947 = vmatprep.subr.bf16.mxu0 0
        %948 = vmatpush1.bf16.msra.mxu0 %v913
        %949 = vmatprep.subr.bf16.mxu0 0
        %950 = vmatpush1.bf16.msra.mxu0 %v914
        %951 = vmatprep.subr.bf16.mxu0 0
        %952 = vmatpush1.bf16.msra.mxu0 %v915
        %953 = vmatprep.subr.bf16.mxu0 0
        %954 = vmatpush1.bf16.msra.mxu0 %v916
        %955 = vmatprep.subr.bf16.mxu0 0
        %956 = vmatpush1.bf16.msra.mxu0 %v917
        %957 = vmatprep.subr.bf16.mxu0 0
        %958 = vmatpush1.bf16.msra.mxu0 %v918
        %959 = vmatprep.subr.bf16.mxu0 0
        %960 = vmatpush1.bf16.msra.mxu0 %v919
        %961 = vmatprep.subr.bf16.mxu0 0
        %962 = vmatpush1.bf16.msra.mxu0 %v920
        %963 = vmatprep.subr.bf16.mxu0 0
        %964 = vmatpush1.bf16.msra.mxu0 %v921
        %965 = vmatprep.subr.bf16.mxu0 0
        %966 = vmatpush1.bf16.msra.mxu0 %v922
        %967 = vmatprep.subr.bf16.mxu0 0
        %968 = vmatpush1.bf16.msra.mxu0 %v923
        %969 = vmatprep.subr.bf16.mxu0 0
        %970 = vmatpush1.bf16.msra.mxu0 %v924
        %971 = vmatprep.subr.bf16.mxu0 0
        %972 = vmatpush1.bf16.msra.mxu0 %v925
        %973 = vmatprep.subr.bf16.mxu0 0
        %974 = vmatpush1.bf16.msra.mxu0 %v926
        %975 = vmatprep.mubr.bf16.mxu0 %v807
        %976 = vmatmul.mubr.bf16.gmra.mrb[0].mxu0 %v806
        %v977 = vpop.f32.mrb[0].mxu0
        %v978 = vadd.f32 %v845, %v977
        %v979 = vpop.f32.mrb[0].mxu0
        %v980 = vpop.f32.mrb[0].mxu0
        %v981 = vadd.f32 %v845, %v980
        %v982 = vpop.f32.mrb[0].mxu0
        %983 = vdwg.mxu0
        %v984 = vmax.f32 %v978, 0.0
        %v985 = vmax.f32 %v981, 0.0
        %v986 = vadd.f32 %v984, %v795
        %v987 = vadd.f32 %v985, %v796
        %v988 = vmax.f32 %v986, 0.0
        %v989 = vmax.f32 %v987, 0.0
        %v990 = vrot.slane %v988, 4
        %v991 = vrot.slane %v989, 4
        %vm992 = vcmp.lt.s32.totalorder %v484, 4
        %v993 = vsel %vm992, %v990, %v991
        %v994 = vsel %vm992, %v991, %v990
        %vm995 = vcmp.ge.s32.totalorder %v484, 4
        %vm996 = vcmp.ge.s32.totalorder %v485, 4
        %v997 = vsel %vm995, %v994, 0.0
        %v998 = vsel %vm996, %v993, 0.0
        %v999 = vpack.c.bf16 %v998, %v997
        %v1000 = vpack.c.bf16 %v989, %v988
        %v1001 = vld [vmem:[#allocation10] sm:$0xf]
        %v1002 = vld [vmem:[#allocation10 + $0x4] sm:$0xf]
        %v1003 = vld [vmem:[#allocation10 + $0x8] sm:$0xf]
        %v1004 = vld [vmem:[#allocation10 + $0xc] sm:$0xf]
        %v1005 = vld [vmem:[#allocation10 + $0x10] sm:$0xf]
        %v1006 = vld [vmem:[#allocation10 + $0x14] sm:$0xf]
        %v1007 = vld [vmem:[#allocation10 + $0x18] sm:$0xf]
        %v1008 = vld [vmem:[#allocation10 + $0x1c] sm:$0xf]
        %v1009 = vld [vmem:[#allocation10 + $0x20] sm:$0xf]
        %v1010 = vld [vmem:[#allocation10 + $0x24] sm:$0xf]
        %v1011 = vld [vmem:[#allocation10 + $0x28] sm:$0xf]
        %v1012 = vld [vmem:[#allocation10 + $0x2c] sm:$0xf]
        %v1013 = vld [vmem:[#allocation10 + $0x30] sm:$0xf]
        %v1014 = vld [vmem:[#allocation10 + $0x34] sm:$0xf]
        %v1015 = vld [vmem:[#allocation10 + $0x38] sm:$0xf]
        %v1016 = vld [vmem:[#allocation10 + $0x3c] sm:$0xf]
        %v1017 = vld [vmem:[#allocation10 + $0x40] sm:$0xf]
        %v1018 = vld [vmem:[#allocation10 + $0x44] sm:$0xf]
        %v1019 = vld [vmem:[#allocation10 + $0x48] sm:$0xf]
        %v1020 = vld [vmem:[#allocation10 + $0x4c] sm:$0xf]
        %v1021 = vld [vmem:[#allocation10 + $0x50] sm:$0xf]
        %v1022 = vld [vmem:[#allocation10 + $0x54] sm:$0xf]
        %v1023 = vld [vmem:[#allocation10 + $0x58] sm:$0xf]
        %v1024 = vld [vmem:[#allocation10 + $0x5c] sm:$0xf]
        %v1025 = vld [vmem:[#allocation10 + $0x60] sm:$0xf]
        %v1026 = vld [vmem:[#allocation10 + $0x64] sm:$0xf]
        %v1027 = vld [vmem:[#allocation10 + $0x68] sm:$0xf]
        %v1028 = vld [vmem:[#allocation10 + $0x6c] sm:$0xf]
        %v1029 = vld [vmem:[#allocation10 + $0x70] sm:$0xf]
        %v1030 = vld [vmem:[#allocation10 + $0x74] sm:$0xf]
        %v1031 = vld [vmem:[#allocation10 + $0x78] sm:$0xf]
        %v1032 = vld [vmem:[#allocation10 + $0x7c] sm:$0xf]
        %v1033 = vld [vmem:[%s8] sm:$0x1]
        %v1035 = vlaneseq
        %v1036 = vshrl.u32 %v1035, 7
        %v1037 = vsub.s32 0, %v1036
        %v1038 = vrot.slane %v1033, %v1037
        %v1072 = vunpack.c.l.b16 %v1001
        %v1073 = vunpack.c.l.b16 %v1002
        %v1074 = vunpack.c.l.b16 %v1003
        %v1075 = vunpack.c.l.b16 %v1004
        %v1076 = vunpack.c.l.b16 %v1005
        %v1077 = vunpack.c.l.b16 %v1006
        %v1078 = vunpack.c.l.b16 %v1007
        %v1079 = vunpack.c.l.b16 %v1008
        %v1080 = vunpack.c.l.b16 %v1009
        %v1081 = vunpack.c.l.b16 %v1010
        %v1082 = vunpack.c.l.b16 %v1011
        %v1083 = vunpack.c.l.b16 %v1012
        %v1084 = vunpack.c.l.b16 %v1013
        %v1085 = vunpack.c.l.b16 %v1014
        %v1086 = vunpack.c.l.b16 %v1015
        %v1087 = vunpack.c.l.b16 %v1016
        %v1088 = vunpack.c.l.b16 %v1017
        %v1089 = vunpack.c.l.b16 %v1018
        %v1090 = vunpack.c.l.b16 %v1019
        %v1091 = vunpack.c.l.b16 %v1020
        %v1092 = vunpack.c.l.b16 %v1021
        %v1093 = vunpack.c.l.b16 %v1022
        %v1094 = vunpack.c.l.b16 %v1023
        %v1095 = vunpack.c.l.b16 %v1024
        %v1096 = vunpack.c.l.b16 %v1025
        %v1097 = vunpack.c.l.b16 %v1026
        %v1098 = vunpack.c.l.b16 %v1027
        %v1099 = vunpack.c.l.b16 %v1028
        %v1100 = vunpack.c.l.b16 %v1029
        %v1101 = vunpack.c.l.b16 %v1030
        %v1102 = vunpack.c.l.b16 %v1031
        %v1103 = vunpack.c.l.b16 %v1032
        %v1104 = vpack.c.b16 %v1073, %v1072
        %v1105 = vpack.c.b16 %v1075, %v1074
        %v1106 = vpack.c.b16 %v1077, %v1076
        %v1107 = vpack.c.b16 %v1079, %v1078
        %v1108 = vpack.c.b16 %v1081, %v1080
        %v1109 = vpack.c.b16 %v1083, %v1082
        %v1110 = vpack.c.b16 %v1085, %v1084
        %v1111 = vpack.c.b16 %v1087, %v1086
        %v1112 = vpack.c.b16 %v1089, %v1088
        %v1113 = vpack.c.b16 %v1091, %v1090
        %v1114 = vpack.c.b16 %v1093, %v1092
        %v1115 = vpack.c.b16 %v1095, %v1094
        %v1116 = vpack.c.b16 %v1097, %v1096
        %v1117 = vpack.c.b16 %v1099, %v1098
        %v1118 = vpack.c.b16 %v1101, %v1100
        %v1119 = vpack.c.b16 %v1103, %v1102
        %1136 = vmatprep.subr.bf16.mxu0 0
        %1137 = vmatpush1.bf16.msra.mxu0 %v1104
        %1138 = vmatprep.subr.bf16.mxu0 0
        %1139 = vmatpush1.bf16.msra.mxu0 %v1105
        %1140 = vmatprep.subr.bf16.mxu0 0
        %1141 = vmatpush1.bf16.msra.mxu0 %v1106
        %1142 = vmatprep.subr.bf16.mxu0 0
        %1143 = vmatpush1.bf16.msra.mxu0 %v1107
        %1144 = vmatprep.subr.bf16.mxu0 0
        %1145 = vmatpush1.bf16.msra.mxu0 %v1108
        %1146 = vmatprep.subr.bf16.mxu0 0
        %1147 = vmatpush1.bf16.msra.mxu0 %v1109
        %1148 = vmatprep.subr.bf16.mxu0 0
        %1149 = vmatpush1.bf16.msra.mxu0 %v1110
        %1150 = vmatprep.subr.bf16.mxu0 0
        %1151 = vmatpush1.bf16.msra.mxu0 %v1111
        %1152 = vmatprep.subr.bf16.mxu0 0
        %1153 = vmatpush1.bf16.msra.mxu0 %v1112
        %1154 = vmatprep.subr.bf16.mxu0 0
        %1155 = vmatpush1.bf16.msra.mxu0 %v1113
        %1156 = vmatprep.subr.bf16.mxu0 0
        %1157 = vmatpush1.bf16.msra.mxu0 %v1114
        %1158 = vmatprep.subr.bf16.mxu0 0
        %1159 = vmatpush1.bf16.msra.mxu0 %v1115
        %1160 = vmatprep.subr.bf16.mxu0 0
        %1161 = vmatpush1.bf16.msra.mxu0 %v1116
        %1162 = vmatprep.subr.bf16.mxu0 0
        %1163 = vmatpush1.bf16.msra.mxu0 %v1117
        %1164 = vmatprep.subr.bf16.mxu0 0
        %1165 = vmatpush1.bf16.msra.mxu0 %v1118
        %1166 = vmatprep.subr.bf16.mxu0 0
        %1167 = vmatpush1.bf16.msra.mxu0 %v1119
        %1168 = vmatprep.mubr.bf16.mxu0 %v1000
        %1169 = vmatmul.mubr.bf16.gmra.mrb[0].mxu0 %v999
        %v1170 = vpop.f32.mrb[0].mxu0
        %v1171 = vadd.f32 %v1038, %v1170
        %v1172 = vpop.f32.mrb[0].mxu0
        %v1173 = vpop.f32.mrb[0].mxu0
        %v1174 = vadd.f32 %v1038, %v1173
        %v1175 = vpop.f32.mrb[0].mxu0
        %1176 = vdwg.mxu0
        %v1177 = vmax.f32 %v1171, 0.0
        %v1178 = vmax.f32 %v1174, 0.0
        %v1179 = vld [vmem:[#allocation11] sm:$0xf]
        %v1180 = vld [vmem:[#allocation11 + $0x4] sm:$0xf]
        %v1181 = vld [vmem:[#allocation11 + $0x8] sm:$0xf]
        %v1182 = vld [vmem:[#allocation11 + $0xc] sm:$0xf]
        %v1183 = vld [vmem:[#allocation11 + $0x10] sm:$0xf]
        %v1184 = vld [vmem:[#allocation11 + $0x14] sm:$0xf]
        %v1185 = vld [vmem:[#allocation11 + $0x18] sm:$0xf]
        %v1186 = vld [vmem:[#allocation11 + $0x1c] sm:$0xf]
        %v1187 = vld [vmem:[#allocation11 + $0x20] sm:$0xf]
        %v1188 = vld [vmem:[#allocation11 + $0x24] sm:$0xf]
        %v1189 = vld [vmem:[#allocation11 + $0x28] sm:$0xf]
        %v1190 = vld [vmem:[#allocation11 + $0x2c] sm:$0xf]
        %v1191 = vld [vmem:[#allocation11 + $0x30] sm:$0xf]
        %v1192 = vld [vmem:[#allocation11 + $0x34] sm:$0xf]
        %v1193 = vld [vmem:[#allocation11 + $0x38] sm:$0xf]
        %v1194 = vld [vmem:[#allocation11 + $0x3c] sm:$0xf]
        %v1195 = vld [vmem:[%s10] sm:$0x1]
        %v1197 = vlaneseq
        %v1198 = vshrl.u32 %v1197, 7
        %v1199 = vsub.s32 0, %v1198
        %v1200 = vrot.slane %v1195, %v1199
        %v1218 = vunpack.c.l.b16 %v1179
        %v1219 = vunpack.c.l.b16 %v1180
        %v1220 = vunpack.c.l.b16 %v1181
        %v1221 = vunpack.c.l.b16 %v1182
        %v1222 = vunpack.c.l.b16 %v1183
        %v1223 = vunpack.c.l.b16 %v1184
        %v1224 = vunpack.c.l.b16 %v1185
        %v1225 = vunpack.c.l.b16 %v1186
        %v1226 = vunpack.c.l.b16 %v1187
        %v1227 = vunpack.c.l.b16 %v1188
        %v1228 = vunpack.c.l.b16 %v1189
        %v1229 = vunpack.c.l.b16 %v1190
        %v1230 = vunpack.c.l.b16 %v1191
        %v1231 = vunpack.c.l.b16 %v1192
        %v1232 = vunpack.c.l.b16 %v1193
        %v1233 = vunpack.c.l.b16 %v1194
        %v1234 = vpack.c.b16 %v1219, %v1218
        %v1235 = vpack.c.b16 %v1221, %v1220
        %v1236 = vpack.c.b16 %v1223, %v1222
        %v1237 = vpack.c.b16 %v1225, %v1224
        %v1238 = vpack.c.b16 %v1227, %v1226
        %v1239 = vpack.c.b16 %v1229, %v1228
        %v1240 = vpack.c.b16 %v1231, %v1230
        %v1241 = vpack.c.b16 %v1233, %v1232
        %1250 = vmatprep.subr.bf16.mxu0 0
        %1251 = vmatpush1.bf16.msra.mxu0 %v1234
        %1252 = vmatprep.subr.bf16.mxu0 0
        %1253 = vmatpush1.bf16.msra.mxu0 %v1235
        %1254 = vmatprep.subr.bf16.mxu0 0
        %1255 = vmatpush1.bf16.msra.mxu0 %v1236
        %1256 = vmatprep.subr.bf16.mxu0 0
        %1257 = vmatpush1.bf16.msra.mxu0 %v1237
        %1258 = vmatprep.subr.bf16.mxu0 0
        %1259 = vmatpush1.bf16.msra.mxu0 %v1238
        %1260 = vmatprep.subr.bf16.mxu0 0
        %1261 = vmatpush1.bf16.msra.mxu0 %v1239
        %1262 = vmatprep.subr.bf16.mxu0 0
        %1263 = vmatpush1.bf16.msra.mxu0 %v1240
        %1264 = vmatprep.subr.bf16.mxu0 0
        %1265 = vmatpush1.bf16.msra.mxu0 %v1241
        %1266 = vmatprep.subr.bf16.mxu0 0
        %1267 = vmatpush1.bf16.msra.mxu0 0
        %1268 = vmatprep.subr.bf16.mxu0 0
        %1269 = vmatpush1.bf16.msra.mxu0 0
        %1270 = vmatprep.subr.bf16.mxu0 0
        %1271 = vmatpush1.bf16.msra.mxu0 0
        %1272 = vmatprep.subr.bf16.mxu0 0
        %1273 = vmatpush1.bf16.msra.mxu0 0
        %1274 = vmatprep.subr.bf16.mxu0 0
        %1275 = vmatpush1.bf16.msra.mxu0 0
        %1276 = vmatprep.subr.bf16.mxu0 0
        %1277 = vmatpush1.bf16.msra.mxu0 0
        %1278 = vmatprep.subr.bf16.mxu0 0
        %1279 = vmatpush1.bf16.msra.mxu0 0
        %1280 = vmatprep.subr.bf16.mxu0 0
        %1281 = vmatpush1.bf16.msra.mxu0 0
        %1282 = vmatprep.mubr.bf16.mxu0 0
        %1283 = vmatmul.mubr.bf16.gmra.mrb[0].mxu0 %v1000
        %v1284 = vpop.f32.mrb[0].mxu0
        %v1285 = vadd.f32 %v1200, %v1284
        %v1286 = vpop.f32.mrb[0].mxu0
        %v1287 = vpop.f32.mrb[0].mxu0
        %v1288 = vadd.f32 %v1200, %v1287
        %v1289 = vpop.f32.mrb[0].mxu0
        %1290 = vdwg.mxu0
        %v1291 = vadd.f32 %v1177, %v1285
        %v1292 = vadd.f32 %v1178, %v1288
        %v1293 = vmax.f32 %v1291, 0.0
        %v1294 = vmax.f32 %v1292, 0.0
        %1295 = vst [vmem:[%s477] sm:$0xff] %v1293
        %1296 = vst [vmem:[%s477 + $0x8] sm:$0xff] %v1294
        %s1297 = sand.u32 %s275, 1
        %s1298 = scalar_lea.sflag [#allocation4], %s1297
        %s1299 = sand.u32 %s275, 1
        %s1300 = smul.addr %s1299, 16
        %s1301 = scalar_lea.vmem [#allocation13], %s1300
        // Predicated region
        $region89: #{tpu_custom_call.1} parent=63 // pred_check
          %p1302 = pneg %p285
        $region90: #{tpu_custom_call.1} parent=63 // pred_check_branch
          %1304 = sbr.rel (%p1302) target = $region92
        $region91: #{tpu_custom_call.1} parent=63 // pred_region
          %s1306 = ssub.s32 256, 256
          %1307 = vsyncadd %s1298, %s1306
          %s1308 = smul.addr %s31, 2
          %s1309 = smul.addr %s1308, 128
          %s1310 = scalar_lea.hbm %s11, %s1309
          %s1311 = sshll.u32 %s1301, 4
          %s1312 = int_to_ptr.vmem [resolvable:$true] %s1311
          %1317 = dma.vmem_to_hbm [thread:$0]  %s1312, 256, %s1310, %s1298, 128, 128, 8
        $region92: #{tpu_custom_call.1} parent=63 // pred_fallthru
          _
      $region64: #{tpu_custom_call.1} parent=5 // pred_fallthru
        _
      %p1318 = scmp.le.s32.totalorder 2, %s26
      // Predicated region
      $region93: #{tpu_custom_call.1} parent=5 // pred_check
        %p1319 = pneg %p1318
      $region94: #{tpu_custom_call.1} parent=5 // pred_check_branch
        %1321 = sbr.rel (%p1319) target = $region96
      $region95: #{tpu_custom_call.1} parent=5 // pred_region
        %s1322 = ssub.s32 %s26, 2
        // Predicated region
        $region97: #{tpu_custom_call.1} parent=95 // pred_check
          %p1323 = pneg %p291
        $region98: #{tpu_custom_call.1} parent=95 // pred_check_branch
          %1325 = sbr.rel (%p1323) target = $region100
        $region99: #{tpu_custom_call.1} parent=95 // pred_region
          %s1326 = sand.u32 %s276, 1
          %s1327 = scalar_lea.sflag [#allocation4], %s1326
          %s1328 = sand.u32 %s276, 1
          %s1329 = smul.addr %s1328, 16
          %s1330 = scalar_lea.vmem [#allocation13], %s1329
          %1331 = dma.done %s1327, 256
        $region100: #{tpu_custom_call.1} parent=95 // pred_fallthru
          _
      $region96: #{tpu_custom_call.1} parent=5 // pred_fallthru
        _
    $region6: #{tpu_custom_call.1} parent=1 // loop_footer
      %s30 = sadd.s32 1, %s26
    $region7: #{tpu_custom_call.1} parent=1 // loop_footer_branch
      %25 = sbr.rel target = $region3
    $region8: #{tpu_custom_call.1} parent=1 // loop_exit
      _
    %1332 = vsyncpa [#allocation3], 1
    %s1333 = scalar_lea.sflag [#allocation3], 1
    %1334 = vsyncpa %s1333, 1
    %1335 = vsyncpa [#allocation6], 1
    %1336 = vsyncpa [#allocation9], 1
    %1337 = vsyncpa [#allocation12], 1
    %1338 = vsyncpa [#allocation4], 1
    %s1339 = scalar_lea.sflag [#allocation4], 1
    %1340 = vsyncpa %s1339, 1

</llo_original>
